<compile_context>
chip_gen: v7x
topology: tpu7x:2x2x1
jax: 0.10.0
libtpu: 0.0.40
codegen_flags: <defaults>
</compile_context>

<pallas_src>
import math
import functools

import jax
import jax.numpy as jnp
from jax import lax
from jax.experimental import pallas as pl
from jax.experimental.pallas import tpu as pltpu


_NEG_INF = -1e30                          # finite mask value: no NaN from masked entries
_SINGLE_BUFFER_BYTES = 1 << 20            # constant blocks >= 1 MiB get pl.Buffered(1)
_FALLBACK_VMEM_LIMIT = 48 * 1024 * 1024   # safe everywhere (below v7x physical 64 MiB)


def _vmem_limit_bytes():
    """Generation-aware scoped-VMEM limit (~85% of physical; v7x has half of v5e/v6e)."""
    try:
        cap = pltpu.get_tpu_info().vmem_capacity_bytes
        return int(cap * 0.85)
    except Exception:
        return _FALLBACK_VMEM_LIMIT


def _weight_buffer_count(nbytes):
    # Constant (index-map-invariant) blocks never re-DMA, so double-buffering big ones
    # is pure VMEM waste; tiny ones keep the default (nothing worth saving).
    return 1 if nbytes >= _SINGLE_BUFFER_BYTES else 2


def _const_spec(shape, dtype):
    """BlockSpec for a grid-invariant operand (weights / biases / LN params)."""
    nbytes = int(jnp.dtype(dtype).itemsize) * math.prod(shape)
    index_map = lambda *_: (0,) * len(shape)
    if _weight_buffer_count(nbytes) == 1:
        return pl.BlockSpec(shape, index_map, pipeline_mode=pl.Buffered(1))
    return pl.BlockSpec(shape, index_map)


def _pick_tile(n, candidates, need_fn, budget):
    """Largest candidate dividing n whose VMEM estimate fits the budget."""
    divs = [c for c in candidates if c <= n and n % c == 0]
    if not divs:
        return n
    for c in divs:                         # descending preference
        if need_fn(c) <= budget:
            return c
    return divs[-1]                        # smallest divisor; compiler limit is the backstop


# --------------------------------------------------------------------------------------
# One-time weight preparation (outside the step function: no per-call HBM convert traffic)
# --------------------------------------------------------------------------------------
def prepare_params(params, *, n_heads, compute_dtype=jnp.float32):
    del n_heads  # layout is head-agnostic (heads are contiguous output-column blocks)
    cd = jnp.dtype(compute_dtype)
    C = params["wq"].shape[0]
    scale = 1.0 / math.sqrt(C)             # reference divides by sqrt(embed_dim)
    wqkv = jnp.concatenate(
        [params["wq"] * scale, params["wk"], params["wv"]], axis=1)   # (C, 3C), f32 fold
    return {
        "wqkv": wqkv.astype(cd),
        "wp": params["wp"].astype(cd),
        "w1": params["w1"].astype(cd),
        "w2": params["w2"].astype(cd),
        "bp": params["bp"], "b1": params["b1"], "b2": params["b2"],
        "ln1_g": params["ln1_g"], "ln1_b": params["ln1_b"],
        "ln2_g": params["ln2_g"], "ln2_b": params["ln2_b"],
    }


# --------------------------------------------------------------------------------------
# Kernel 1: LayerNorm1 + fused QKV projection -> lane-dense (B, T, C) q/k/v.
# Grid: (B, T // Tr), both axes parallel.
# --------------------------------------------------------------------------------------
def ln_qkv_kernel(x_ref, wqkv_ref, g1_ref, b1_ref, q_ref, k_ref, v_ref, *, eps):
    x = x_ref[0]                                        # (Tr, C) f32
    c = x.shape[-1]

    # Two-pass LayerNorm statistics (avoids E[x^2]-mu^2 catastrophic cancellation).
    mu = jnp.mean(x, axis=-1, keepdims=True)
    xc = x - mu
    var = jnp.mean(xc * xc, axis=-1, keepdims=True)
    h1 = xc * lax.rsqrt(var + eps) * g1_ref[0] + b1_ref[0]

    # Single fused QKV matmul: (Tr, C) @ (C, 3C).  1/sqrt(C) is already folded into the
    # q columns of wqkv, so no extra elementwise scale here.
    qkv = jnp.dot(h1.astype(wqkv_ref.dtype), wqkv_ref[...],
                  preferred_element_type=jnp.float32)

    # Lane-dense (Tr, C) stores: full-width vector stores, no head-minor masked vst.
    q_ref[0] = qkv[:, 0 * c:1 * c].astype(q_ref.dtype)
    k_ref[0] = qkv[:, 1 * c:2 * c].astype(k_ref.dtype)
    v_ref[0] = qkv[:, 2 * c:3 * c].astype(v_ref.dtype)


# --------------------------------------------------------------------------------------
# Kernel 2: flash-style causal attention (online softmax over KV blocks) fused with the
# output projection, residual adds, LayerNorm2 and the FFN, all on one query-row block.
# Grid: (B, T // Tq, T // Tk) with the KV axis "arbitrary" (reduction).
# --------------------------------------------------------------------------------------
def attn_ffn_kernel(x_ref, q_ref, k_ref, v_ref,
                    wp_ref, bp_ref, w1_ref, b1_ref, w2_ref, b2_ref,
                    g2_ref, be2_ref,
                    o_ref,
                    m_sc, l_sc, acc_sc, *,
                    n_heads, tq, tk, eps, approx_recip):
    i = pl.program_id(1)              # query-row block
    j = pl.program_id(2)              # kv block
    nj = pl.num_programs(2)

    c = acc_sc.shape[-1]
    d = c // n_heads
    cd = q_ref.dtype                  # compute dtype for MXU inputs

    @pl.when(j == 0)
    def _():
        m_sc[...] = jnp.full_like(m_sc, _NEG_INF)
        l_sc[...] = jnp.zeros_like(l_sc)
        acc_sc[...] = jnp.zeros_like(acc_sc)

    def flash_update(mask_bias):
        q = q_ref[0]                  # (Tq, C), scale already folded into wq
        k = k_ref[0]                  # (Tk, C)
        v = v_ref[0]                  # (Tk, C)
        for h in range(n_heads):      # static: heads live in contiguous lane slices
            sl = slice(h * d, (h + 1) * d)
            s = lax.dot_general(q[:, sl], k[:, sl], (((1,), (1,)), ((), ())),
                                preferred_element_type=jnp.float32)   # (Tq, Tk)
            if mask_bias is not None:
                s = s + mask_bias
            m_prev = m_sc[:, h:h + 1]
            m_new = jnp.maximum(m_prev, jnp.max(s, axis=-1, keepdims=True))
            alpha = jnp.exp(m_prev - m_new)
            p = jnp.exp(s - m_new)
            # TODO(synk): the l row-sum could ride the PV matmul (ones column appended to
            # v) to move this reduce off the XLU; kept as jnp.sum for clarity.
            l_sc[:, h:h + 1] = (alpha * l_sc[:, h:h + 1]
                                + jnp.sum(p, axis=-1, keepdims=True))
            acc_sc[:, sl] = alpha * acc_sc[:, sl] + jnp.dot(
                p.astype(cd), v[:, sl], preferred_element_type=jnp.float32)
            m_sc[:, h:h + 1] = m_new

    live = j * tk < (i + 1) * tq               # block has at least one unmasked element
    straddles = (j + 1) * tk - 1 > i * tq      # block has at least one masked element

    # Diagonal-straddling blocks: build + add the causal bias (shared across heads).
    @pl.when(jnp.logical_and(live, straddles))
    def _():
        rows = i * tq + lax.broadcasted_iota(jnp.int32, (tq, tk), 0)
        cols = j * tk + lax.broadcasted_iota(jnp.int32, (tq, tk), 1)
        flash_update(jnp.where(cols <= rows, 0.0, _NEG_INF))

    # Strictly below-diagonal blocks: no mask work at all.
    @pl.when(jnp.logical_and(live, jnp.logical_not(straddles)))
    def _():
        flash_update(None)

    # Fully-masked blocks fall through (their kv index_map is clamped, so no DMA either).
    # TODO(synk): at large T, replace the rectangular KV grid with a (B, T/Tq) grid plus
    # an in-kernel dynamic-trip KV loop (manual double-buffered DMA) so the causally-dead
    # steps stop paying per-grid-step overhead.

    # Finalize on the last KV step (runs even if that block's compute was skipped).
    @pl.when(j == nj - 1)
    def _():
        inv_l = pl.reciprocal(l_sc[...], approx=approx_recip)          # (Tq, H)
        for h in range(n_heads):    # per-head 1/l scale in place: acc is already lane-dense
            sl = slice(h * d, (h + 1) * d)
            acc_sc[:, sl] = acc_sc[:, sl] * inv_l[:, h:h + 1]
        att = acc_sc[...].astype(cd)                                   # (Tq, C)

        x = x_ref[0]                                                   # (Tq, C) f32 residual
        x1 = x + jnp.dot(att, wp_ref[...],
                         preferred_element_type=jnp.float32) + bp_ref[0]

        # LayerNorm2 (two-pass stats, f32).
        mu = jnp.mean(x1, axis=-1, keepdims=True)
        xc = x1 - mu
        var = jnp.mean(xc * xc, axis=-1, keepdims=True)
        h2 = xc * lax.rsqrt(var + eps) * g2_ref[0] + be2_ref[0]

        # FeedForward.
        ff = jnp.dot(h2.astype(cd), w1_ref[...],
                     preferred_element_type=jnp.float32) + b1_ref[0]
        ff = jnp.maximum(ff, 0.0).astype(cd)
        ff = jnp.dot(ff, w2_ref[...],
                     preferred_element_type=jnp.float32) + b2_ref[0]

        o_ref[0] = (x1 + ff).astype(o_ref.dtype)


# --------------------------------------------------------------------------------------
# Wrapper
# --------------------------------------------------------------------------------------
def transformer_block(x, prepped, *, n_heads, eps=1e-5):
    B, T, C = x.shape
    H = n_heads
    assert C % H == 0
    F = prepped["w1"].shape[1]
    cd = jnp.dtype(prepped["wqkv"].dtype)
    cdb = cd.itemsize
    approx_recip = cd != jnp.dtype(jnp.float32)

    vmem_limit = _vmem_limit_bytes()
    budget = int(vmem_limit * 0.7)          # leave slack for Mosaic internal scratch

    # ---- VMEM-budgeted tiles (generation-aware via vmem_limit) ----
    wqkv_bytes = C * 3 * C * cdb

    def k1_need(tr):
        return (2 * tr * C * 4                               # x blocks (f32, 2 buffers)
                + 2 * 3 * tr * C * cdb                       # q/k/v output blocks
                + _weight_buffer_count(wqkv_bytes) * wqkv_bytes
                + 4 * 2 * C * 4)                             # LN params
    Tr = _pick_tile(T, (512, 256, 128, 64, 32, 16, 8), k1_need, budget)

    k2_weight_bytes = (C * C * cdb, C * F * cdb, F * C * cdb)
    resident_w = sum(_weight_buffer_count(nb) * nb for nb in k2_weight_bytes)

    def k2_need(t):
        return (resident_w
                + 2 * t * C * 4                              # x residual blocks
                + 2 * 3 * t * C * cdb                        # q/k/v blocks
                + 2 * t * C * 4                              # output blocks
                + t * C * 4 + 2 * t * 128 * 4                # acc + m/l scratch (lane pad)
                + 3 * t * t * 4)                             # s/p temporaries + slack
    # v6e/v7x MXU is 2x256^2 -> prefer 256-wide attention tiles when VMEM allows.
    Tq = _pick_tile(T, (256, 128, 64, 32, 16, 8), k2_need, budget)
    Tk = Tq   # Tq == Tk guarantees live KV blocks never contain fully-masked rows.
    # TODO(synk): on v7x, if resident_w exceeds ~1/3 of VMEM, stream w1/w2 K-tiles with
    # pltpu.emit_pipeline in the finalize (or split the FFN into a third pallas_call).

    # ---- Kernel 1: LN1 + fused QKV -> lane-dense (B, T, C) q/k/v ----
    qkv_shape = jax.ShapeDtypeStruct((B, T, C), cd)
    row_spec = lambda: pl.BlockSpec((1, Tr, C), lambda b, r: (b, r, 0))
    q, k, v = pl.pallas_call(
        functools.partial(ln_qkv_kernel, eps=eps),
        out_shape=(qkv_shape, qkv_shape, qkv_shape),
        grid_spec=pltpu.PrefetchScalarGridSpec(
            num_scalar_prefetch=0,
            grid=(B, T // Tr),
            in_specs=[
                row_spec(),                                  # x
                _const_spec((C, 3 * C), cd),                 # wqkv
                _const_spec((1, C), jnp.float32),            # ln1 gamma
                _const_spec((1, C), jnp.float32),            # ln1 beta
            ],
            out_specs=(row_spec(), row_spec(), row_spec()),
        ),
        compiler_params=pltpu.CompilerParams(
            dimension_semantics=("parallel", "parallel"),
            vmem_limit_bytes=vmem_limit),
    )(x, prepped["wqkv"], prepped["ln1_g"], prepped["ln1_b"])

    # ---- Kernel 2: flash attention + proj + residual + LN2 + FFN + residual ----
    n_i = T // Tq
    n_j = T // Tk

    def kv_map(b, i, j):
        # Clamp fully-masked steps onto the last causally-needed KV block: the block index
        # does not change, so no new DMA is issued; their compute is skipped in-kernel.
        jc = jnp.minimum(j, ((i + 1) * Tq - 1) // Tk)
        return (b, jc, 0)

    # TODO(synk): on v5e, raise k/v pipelining depth (pipeline_mode=pl.Buffered(3)) to
    # cover its lower HBM bandwidth.
    out = pl.pallas_call(
        functools.partial(attn_ffn_kernel, n_heads=H, tq=Tq, tk=Tk, eps=eps,
                          approx_recip=approx_recip),
        out_shape=jax.ShapeDtypeStruct((B, T, C), x.dtype),
        grid_spec=pltpu.PrefetchScalarGridSpec(
            num_scalar_prefetch=0,
            grid=(B, n_i, n_j),
            in_specs=[
                pl.BlockSpec((1, Tq, C), lambda b, i, j: (b, i, 0)),    # x (residual)
                pl.BlockSpec((1, Tq, C), lambda b, i, j: (b, i, 0)),    # q (lane-dense)
                pl.BlockSpec((1, Tk, C), kv_map),                       # k
                pl.BlockSpec((1, Tk, C), kv_map),                       # v
                _const_spec((C, C), cd),                                # wp
                _const_spec((1, C), jnp.float32),                       # bp
                _const_spec((C, F), cd),                                # w1
                _const_spec((1, F), jnp.float32),                       # b1
                _const_spec((F, C), cd),                                # w2
                _const_spec((1, C), jnp.float32),                       # b2
                _const_spec((1, C), jnp.float32),                       # ln2 gamma
                _const_spec((1, C), jnp.float32),                       # ln2 beta
            ],
            out_specs=pl.BlockSpec((1, Tq, C), lambda b, i, j: (b, i, 0)),
            scratch_shapes=[
                pltpu.VMEM((Tq, H), jnp.float32),    # running max m (heads in lanes)
                pltpu.VMEM((Tq, H), jnp.float32),    # running denom l
                pltpu.VMEM((Tq, C), jnp.float32),    # running numerator, lane-dense
            ],
        ),
        compiler_params=pltpu.CompilerParams(
            dimension_semantics=("parallel", "parallel", "arbitrary"),
            vmem_limit_bytes=vmem_limit),
    )(x, q, k, v, prepped["wp"], prepped["bp"], prepped["w1"], prepped["b1"],
      prepped["w2"], prepped["b2"], prepped["ln2_g"], prepped["ln2_b"])
    return out


# --------------------------------------------------------------------------------------
# Pure-JAX reference (matches the PyTorch module semantics)
# --------------------------------------------------------------------------------------
def reference(x, params, *, n_heads, eps=1e-5):
    B, T, C = x.shape
    H = n_heads
    D = C // H

    def ln(z, g, b):
        mu = jnp.mean(z, axis=-1, keepdims=True)
        var = jnp.mean((z - mu) ** 2, axis=-1, keepdims=True)
        return (z - mu) / jnp.sqrt(var + eps) * g + b

    h1 = ln(x, params["ln1_g"][0], params["ln1_b"][0])
    q = (h1 @ params["wq"]).reshape(B, T, H, D).transpose(0, 2, 1, 3)
    k = (h1 @ params["wk"]).reshape(B, T, H, D).transpose(0, 2, 1, 3)
    v = (h1 @ params["wv"]).reshape(B, T, H, D).transpose(0, 2, 1, 3)
    wei = jnp.einsum("bhtd,bhsd->bhts", q, k) / math.sqrt(C)
    mask = jnp.tril(jnp.ones((T, T), bool))
    wei = jnp.where(mask, wei, -jnp.inf)
    wei = jax.nn.softmax(wei, axis=-1)
    att = jnp.einsum("bhts,bhsd->bhtd", wei, v)
    att = att.transpose(0, 2, 1, 3).reshape(B, T, C)
    x1 = x + att @ params["wp"] + params["bp"][0]
    h2 = ln(x1, params["ln2_g"][0], params["ln2_b"][0])
    ff = jnp.maximum(h2 @ params["w1"] + params["b1"][0], 0.0) @ params["w2"] + params["b2"][0]
    return x1 + ff


if __name__ == "__main__":
    B, T, C, H, FF = 2, 8, 32, 4, 64

    key = jax.random.PRNGKey(0)
    ks = jax.random.split(key, 16)
    s = 0.1
    params = {
        "wq": s * jax.random.normal(ks[0], (C, C), jnp.float32),
        "wk": s * jax.random.normal(ks[1], (C, C), jnp.float32),
        "wv": s * jax.random.normal(ks[2], (C, C), jnp.float32),
        "wp": s * jax.random.normal(ks[3], (C, C), jnp.float32),
        "bp": s * jax.random.normal(ks[4], (1, C), jnp.float32),
        "w1": s * jax.random.normal(ks[5], (C, FF), jnp.float32),
        "b1": s * jax.random.normal(ks[6], (1, FF), jnp.float32),
        "w2": s * jax.random.normal(ks[7], (FF, C), jnp.float32),
        "b2": s * jax.random.normal(ks[8], (1, C), jnp.float32),
        "ln1_g": 1.0 + 0.05 * jax.random.normal(ks[9], (1, C), jnp.float32),
        "ln1_b": 0.05 * jax.random.normal(ks[10], (1, C), jnp.float32),
        "ln2_g": 1.0 + 0.05 * jax.random.normal(ks[11], (1, C), jnp.float32),
        "ln2_b": 0.05 * jax.random.normal(ks[12], (1, C), jnp.float32),
    }
    x = jax.random.normal(ks[13], (B, T, C), jnp.float32)

    ref = reference(x, params, n_heads=H)

    # f32 path (tight tolerance).  Weight prep is done ONCE outside the step function.
    prepped_f32 = prepare_params(params, n_heads=H, compute_dtype=jnp.float32)
    out = transformer_block(x, prepped_f32, n_heads=H)
    out = jax.block_until_ready(out)
    assert out.shape == (B, T, C)
    assert jnp.allclose(out, ref, atol=1e-3, rtol=1e-3), (
        f"f32 max abs err {jnp.max(jnp.abs(out - ref))}")

    # bf16 MXU-input path (recommended on all generations incl. v5e);
    # f32 accumulation, f32 LN/softmax statistics, f32 residual stream.
    prepped_bf16 = prepare_params(params, n_heads=H, compute_dtype=jnp.bfloat16)
    out_bf16 = jax.block_until_ready(transformer_block(x, prepped_bf16, n_heads=H))
    assert jnp.allclose(out_bf16, ref, atol=1e-1, rtol=1e-1), (
        f"bf16 max abs err {jnp.max(jnp.abs(out_bf16 - ref))}")

    print("KERNEL_OK")
</pallas_src>

<mosaic_0001>
module attributes {stable_mosaic.version = 11 : i64} {
  func.func @ln_qkv_kernel(%arg0: i32, %arg1: i32, %arg2: memref<1x8x32xf32, #tpu.memory_space<vmem>>, %arg3: memref<32x96xf32, #tpu.memory_space<vmem>>, %arg4: memref<1x32xf32, #tpu.memory_space<vmem>>, %arg5: memref<1x32xf32, #tpu.memory_space<vmem>>, %arg6: memref<1x8x32xf32, #tpu.memory_space<vmem>>, %arg7: memref<1x8x32xf32, #tpu.memory_space<vmem>>, %arg8: memref<1x8x32xf32, #tpu.memory_space<vmem>>) attributes {dimension_semantics = [#tpu.dimension_semantics<parallel>, #tpu.dimension_semantics<parallel>], iteration_bounds = array<i64: 2, 1>, scalar_prefetch = 0 : i64, scratch_operands = 0 : i64, tpu.core_type = #tpu.core_type<tc>, window_params = [{transform_indices = @transform_0, window_bounds = array<i64: 1, 8, 32>}, {pipeline_mode = #tpu.pipeline_mode<synchronous>, transform_indices = @transform_1, window_bounds = array<i64: 32, 96>}, {pipeline_mode = #tpu.pipeline_mode<synchronous>, transform_indices = @transform_2, window_bounds = array<i64: 1, 32>}, {pipeline_mode = #tpu.pipeline_mode<synchronous>, transform_indices = @transform_3, window_bounds = array<i64: 1, 32>}, {transform_indices = @transform_4, window_bounds = array<i64: 1, 8, 32>}, {transform_indices = @transform_5, window_bounds = array<i64: 1, 8, 32>}, {transform_indices = @transform_6, window_bounds = array<i64: 1, 8, 32>}]} {
    %c0 = arith.constant 0 : index
    %c0_0 = arith.constant 0 : index
    %c0_1 = arith.constant 0 : index
    %0 = vector.load %arg2[%c0, %c0_0, %c0_1] : memref<1x8x32xf32, #tpu.memory_space<vmem>>, vector<1x8x32xf32>
    %1 = vector.shape_cast %0 : vector<1x8x32xf32> to vector<8x32xf32>
    %cst = arith.constant dense<0.000000e+00> : vector<8xf32>
    %2 = vector.multi_reduction <add>, %1, %cst [1] : vector<8x32xf32> to vector<8xf32>
    %3 = vector.shape_cast %2 : vector<8xf32> to vector<8x1xf32>
    %cst_2 = arith.constant 3.200000e+01 : f32
    %4 = vector.broadcast %cst_2 : f32 to vector<8x1xf32>
    %5 = arith.divf %3, %4 : vector<8x1xf32>
    %6 = vector.broadcast %5 : vector<8x1xf32> to vector<8x32xf32>
    %7 = arith.subf %1, %6 : vector<8x32xf32>
    %8 = arith.mulf %7, %7 : vector<8x32xf32>
    %cst_3 = arith.constant dense<0.000000e+00> : vector<8xf32>
    %9 = vector.multi_reduction <add>, %8, %cst_3 [1] : vector<8x32xf32> to vector<8xf32>
    %10 = vector.shape_cast %9 : vector<8xf32> to vector<8x1xf32>
    %cst_4 = arith.constant 3.200000e+01 : f32
    %11 = vector.broadcast %cst_4 : f32 to vector<8x1xf32>
    %12 = arith.divf %10, %11 : vector<8x1xf32>
    %cst_5 = arith.constant 9.99999974E-6 : f32
    %13 = vector.broadcast %cst_5 : f32 to vector<8x1xf32>
    %14 = arith.addf %12, %13 : vector<8x1xf32>
    %15 = math.rsqrt %14 : vector<8x1xf32>
    %16 = vector.broadcast %15 : vector<8x1xf32> to vector<8x32xf32>
    %17 = arith.mulf %7, %16 : vector<8x32xf32>
    %c0_6 = arith.constant 0 : index
    %c0_7 = arith.constant 0 : index
    %18 = vector.load %arg4[%c0_6, %c0_7] : memref<1x32xf32, #tpu.memory_space<vmem>>, vector<1x32xf32>
    %19 = vector.shape_cast %18 : vector<1x32xf32> to vector<32xf32>
    %20 = vector.shape_cast %19 : vector<32xf32> to vector<1x32xf32>
    %21 = vector.broadcast %20 : vector<1x32xf32> to vector<8x32xf32>
    %22 = arith.mulf %17, %21 : vector<8x32xf32>
    %c0_8 = arith.constant 0 : index
    %c0_9 = arith.constant 0 : index
    %23 = vector.load %arg5[%c0_8, %c0_9] : memref<1x32xf32, #tpu.memory_space<vmem>>, vector<1x32xf32>
    %24 = vector.shape_cast %23 : vector<1x32xf32> to vector<32xf32>
    %25 = vector.shape_cast %24 : vector<32xf32> to vector<1x32xf32>
    %26 = vector.broadcast %25 : vector<1x32xf32> to vector<8x32xf32>
    %27 = arith.addf %22, %26 : vector<8x32xf32>
    %c0_10 = arith.constant 0 : index
    %c0_11 = arith.constant 0 : index
    %28 = vector.load %arg3[%c0_10, %c0_11] : memref<32x96xf32, #tpu.memory_space<vmem>>, vector<32x96xf32>
    %cst_12 = arith.constant dense<0.000000e+00> : vector<8x96xf32>
    %29 = tpu.matmul %27, %28, %cst_12 {dimension_numbers = #tpu.dot_dimension_numbers<[1], [0], [0], [1], [0, 0, 1, 1], [], []>} : vector<8x32xf32>, vector<32x96xf32>, vector<8x96xf32> -> vector<8x96xf32>
    %30 = vector.extract_strided_slice %29 {offsets = [0, 0], sizes = [8, 32], strides = [1, 1]} : vector<8x96xf32> to vector<8x32xf32>
    %c0_13 = arith.constant 0 : index
    %c0_14 = arith.constant 0 : index
    %c0_15 = arith.constant 0 : index
    %31 = vector.load %arg6[%c0_13, %c0_14, %c0_15] : memref<1x8x32xf32, #tpu.memory_space<vmem>>, vector<1x8x32xf32>
    %32 = vector.shape_cast %31 : vector<1x8x32xf32> to vector<8x32xf32>
    %33 = vector.shape_cast %30 : vector<8x32xf32> to vector<1x8x32xf32>
    tpu.vector_store %arg6[%c0_13, %c0_14, %c0_15], %33 {strides = array<i32>} : memref<1x8x32xf32, #tpu.memory_space<vmem>>, vector<1x8x32xf32>,
    %34 = vector.extract_strided_slice %29 {offsets = [0, 32], sizes = [8, 32], strides = [1, 1]} : vector<8x96xf32> to vector<8x32xf32>
    %c0_16 = arith.constant 0 : index
    %c0_17 = arith.constant 0 : index
    %c0_18 = arith.constant 0 : index
    %35 = vector.load %arg7[%c0_16, %c0_17, %c0_18] : memref<1x8x32xf32, #tpu.memory_space<vmem>>, vector<1x8x32xf32>
    %36 = vector.shape_cast %35 : vector<1x8x32xf32> to vector<8x32xf32>
    %37 = vector.shape_cast %34 : vector<8x32xf32> to vector<1x8x32xf32>
    tpu.vector_store %arg7[%c0_16, %c0_17, %c0_18], %37 {strides = array<i32>} : memref<1x8x32xf32, #tpu.memory_space<vmem>>, vector<1x8x32xf32>,
    %38 = vector.extract_strided_slice %29 {offsets = [0, 64], sizes = [8, 32], strides = [1, 1]} : vector<8x96xf32> to vector<8x32xf32>
    %c0_19 = arith.constant 0 : index
    %c0_20 = arith.constant 0 : index
    %c0_21 = arith.constant 0 : index
    %39 = vector.load %arg8[%c0_19, %c0_20, %c0_21] : memref<1x8x32xf32, #tpu.memory_space<vmem>>, vector<1x8x32xf32>
    %40 = vector.shape_cast %39 : vector<1x8x32xf32> to vector<8x32xf32>
    %41 = vector.shape_cast %38 : vector<8x32xf32> to vector<1x8x32xf32>
    tpu.vector_store %arg8[%c0_19, %c0_20, %c0_21], %41 {strides = array<i32>} : memref<1x8x32xf32, #tpu.memory_space<vmem>>, vector<1x8x32xf32>,
    return
  }
  func.func @transform_0(%arg0: i32, %arg1: i32) -> (i32, i32, i32) {
    %c0_i32 = arith.constant 0 : i32
    %c0_i32_0 = arith.constant 0 : i32
    return %arg0, %arg1, %c0_i32 : i32, i32, i32
  }
  func.func @transform_1(%arg0: i32, %arg1: i32) -> (i32, i32) {
    %c0_i32 = arith.constant 0 : i32
    %c0_i32_0 = arith.constant 0 : i32
    %c0_i32_1 = arith.constant 0 : i32
    return %c0_i32, %c0_i32_0 : i32, i32
  }
  func.func @transform_2(%arg0: i32, %arg1: i32) -> (i32, i32) {
    %c0_i32 = arith.constant 0 : i32
    %c0_i32_0 = arith.constant 0 : i32
    %c0_i32_1 = arith.constant 0 : i32
    return %c0_i32, %c0_i32_0 : i32, i32
  }
  func.func @transform_3(%arg0: i32, %arg1: i32) -> (i32, i32) {
    %c0_i32 = arith.constant 0 : i32
    %c0_i32_0 = arith.constant 0 : i32
    %c0_i32_1 = arith.constant 0 : i32
    return %c0_i32, %c0_i32_0 : i32, i32
  }
  func.func @transform_4(%arg0: i32, %arg1: i32) -> (i32, i32, i32) {
    %c0_i32 = arith.constant 0 : i32
    %c0_i32_0 = arith.constant 0 : i32
    return %arg0, %arg1, %c0_i32 : i32, i32, i32
  }
  func.func @transform_5(%arg0: i32, %arg1: i32) -> (i32, i32, i32) {
    %c0_i32 = arith.constant 0 : i32
    %c0_i32_0 = arith.constant 0 : i32
    return %arg0, %arg1, %c0_i32 : i32, i32, i32
  }
  func.func @transform_6(%arg0: i32, %arg1: i32) -> (i32, i32, i32) {
    %c0_i32 = arith.constant 0 : i32
    %c0_i32_0 = arith.constant 0 : i32
    return %arg0, %arg1, %c0_i32 : i32, i32, i32
  }
}

</mosaic_0001>

<llo_original>
// kernel: tpu_custom_call.1
$region0: #{tpu_custom_call.1}
  #allocation0 [shape = 'u32[]', space=smem, size = 0x4, offset = 0x4, fixed_abs, tag = 'smem constant byte address 0x4 - core index']
  #allocation1 [shape = 'u32[144,128]{1,0:T(1,128)}', space=vmem, size = 0x12000, scoped, tag = 'internal scratch']
  %s0 = inlined_call_operand.hbm [shape: f32[2,8,32], index: 0, kind: input, shape index: {}]
  %s1 = inlined_call_operand.hbm [shape: f32[32,96], index: 1, kind: input, shape index: {}]
  %s2 = inlined_call_operand.vmem [shape: f32[1,32], index: 2, kind: input, shape index: {}]
  %s3 = inlined_call_operand.vmem [shape: f32[1,32], index: 3, kind: input, shape index: {}]
  %s4 = inlined_call_operand.hbm [shape: f32[2,8,32], index: 4, kind: output, shape index: {0}]
  %s5 = inlined_call_operand.hbm [shape: f32[2,8,32], index: 5, kind: output, shape index: {1}]
  %s6 = inlined_call_operand.hbm [shape: f32[2,8,32], index: 6, kind: output, shape index: {2}]
  %7 = xla_tuple %s4, %s5, %s6
  %s8 = sld [smem:[#allocation0]]
  $region73: #{tpu_custom_call.1} parent=0
    _
  %s10 = ssub.s32 1, %s8
  %s11 = scalar_select 0, %s10, %s8
  $region1: #{tpu_custom_call.1} parent=0
    #allocation2 [shape = 'u8[8192]{0}', space=vmem, size = 0x2000, scoped, tag = 'input window, operand 0']
    #allocation3 [shape = 's32[2]{0}', space=sflag, size = 0x8, scoped, tag = 'scoped memory for tpu_custom_call.1']
    #allocation4 [shape = 's32[2]{0}', space=sflag, size = 0x8, scoped, tag = 'scoped memory for tpu_custom_call.1']
    #allocation5 [shape = 'u8[16384]{0}', space=vmem, size = 0x4000, scoped, tag = 'input window, operand 1, single buffered']
    #allocation6 [shape = 's32[1]{0}', space=sflag, size = 0x4, scoped, tag = 'scoped memory for tpu_custom_call.1']
    #allocation7 [shape = 'u8[8192]{0}', space=vmem, size = 0x2000, scoped, tag = 'output window, operand 0']
    #allocation8 [shape = 'u8[8192]{0}', space=vmem, size = 0x2000, scoped, tag = 'output window, operand 1']
    #allocation9 [shape = 's32[2]{0}', space=sflag, size = 0x8, scoped, tag = 'scoped memory for tpu_custom_call.1']
    #allocation10 [shape = 'u8[8192]{0}', space=vmem, size = 0x2000, scoped, tag = 'output window, operand 2']
    %12 = vsyncpa [#allocation3], 0
    %s13 = scalar_lea.sflag [#allocation3], 1
    %14 = vsyncpa %s13, 0
    %15 = vsyncpa [#allocation6], 0
    %16 = vsyncpa [#allocation4], 0
    %s17 = scalar_lea.sflag [#allocation4], 1
    %18 = vsyncpa %s17, 0
    %19 = vsyncpa [#allocation9], 0
    %s20 = scalar_lea.sflag [#allocation9], 1
    %21 = vsyncpa %s20, 0
    loop: start=0, step=1, limit=4
    $region2: #{tpu_custom_call.1} parent=1 // loop_pre_header
      _
    $region3: #{tpu_custom_call.1} parent=1 // loop_header
      %s23 = sphi 0, %s27
      %p24 = scmp.ge.s32.totalorder %s23, 4
      %s30 = sphi 0, %s42
      %s31 = sphi 0, %s38
      %s32 = sphi 0, %s30
      %s33 = sphi 0, %s31
      %s34 = sphi 0, %s32
      %s35 = sphi 0, %s33
      %s47 = sphi 0, %s49
      %s50 = sphi 0, %s47
      %s51 = sphi 0, %s50
      %s67 = sphi 0, %s51
      %s71 = sphi 0, %s71
      %s73 = sphi 0, %s71
      %s74 = sphi 0, %s73
      %s88 = sphi 0, %s74
      %s92 = sphi 0, %s92
      %s94 = sphi 0, %s92
      %s95 = sphi 0, %s94
      %s109 = sphi 0, %s95
      %s113 = sphi 0, %s113
      %s115 = sphi 0, %s113
      %s116 = sphi 0, %s115
      %s130 = sphi 0, %s116
      %s138 = sphi 0, %s140
      %s141 = sphi 0, %s138
      %s142 = sphi 0, %s141
      %s158 = sphi 0, %s142
      %s166 = sphi 0, %s168
      %s169 = sphi 0, %s166
      %s170 = sphi 0, %s169
      %s186 = sphi 0, %s170
      %s194 = sphi 0, %s196
      %s197 = sphi 0, %s194
      %s198 = sphi 0, %s197
      %s214 = sphi 0, %s198
    $region4: #{tpu_custom_call.1} parent=1 // loop_header_branch
      %26 = sbr.rel (%p24) target = $region8
    $region5: #{tpu_custom_call.1} parent=1 // loop_body
      %s28 = ssub.s32 %s23, 1
      %s29 = ssub.s32 %s23, 2
      %s36 = sadd.s32 1, %s31
      %p37 = scmp.ge.s32.totalorder %s36, 1
      %s38 = scalar_select %p37, 0, %s36
      %s39 = sadd.s32 1, %s30
      %s40 = scalar_select %p37, %s39, %s30
      %p41 = scmp.ge.s32.totalorder %s40, 2
      %s42 = scalar_select %p41, 0, %s40
      %s43 = ssub.s32 %s30, %s42
      %s44 = ssub.s32 %s31, %s38
      %s45 = sor.u32 %s43, %s44
      %p46 = scmp.eq.s32.totalorder %s45, 0
      %s48 = sadd.s32 %s47, 1
      %s49 = scalar_select %p46, %s47, %s48
      %p52 = pneg %p46
      %p53 = scmp.eq.s32.totalorder %s23, 1
      %p54 = por %p52, %p53
      %p55 = scmp.ne.s32.totalorder %s47, %s50
      %p56 = scmp.eq.s32.totalorder %s23, 0
      %p57 = por %p55, %p56
      %p58 = scmp.ne.s32.totalorder %s47, %s50
      %p59 = scmp.eq.s32.totalorder %s28, 1
      %p60 = por %p58, %p59
      %p61 = scmp.ne.s32.totalorder %s50, %s51
      %p62 = scmp.eq.s32.totalorder %s28, 0
      %p63 = por %p61, %p62
      %p64 = scmp.ne.s32.totalorder %s50, %s51
      %p65 = scmp.eq.s32.totalorder %s29, 1
      %p66 = por %p64, %p65
      %p68 = scmp.ne.s32.totalorder %s51, %s67
      %p69 = scmp.eq.s32.totalorder %s29, 0
      %p70 = por %p68, %p69
      %s72 = sadd.s32 %s71, 1
      %p75 = scmp.eq.s32.totalorder %s23, 1
      %p76 = scmp.ne.s32.totalorder %s71, %s73
      %p77 = scmp.eq.s32.totalorder %s23, 0
      %p78 = por %p76, %p77
      %p79 = scmp.ne.s32.totalorder %s71, %s73
      %p80 = scmp.eq.s32.totalorder %s28, 1
      %p81 = por %p79, %p80
      %p82 = scmp.ne.s32.totalorder %s73, %s74
      %p83 = scmp.eq.s32.totalorder %s28, 0
      %p84 = por %p82, %p83
      %p85 = scmp.ne.s32.totalorder %s73, %s74
      %p86 = scmp.eq.s32.totalorder %s29, 1
      %p87 = por %p85, %p86
      %p89 = scmp.ne.s32.totalorder %s74, %s88
      %p90 = scmp.eq.s32.totalorder %s29, 0
      %p91 = por %p89, %p90
      %s93 = sadd.s32 %s92, 1
      %p96 = scmp.eq.s32.totalorder %s23, 1
      %p97 = scmp.ne.s32.totalorder %s92, %s94
      %p98 = scmp.eq.s32.totalorder %s23, 0
      %p99 = por %p97, %p98
      %p100 = scmp.ne.s32.totalorder %s92, %s94
      %p101 = scmp.eq.s32.totalorder %s28, 1
      %p102 = por %p100, %p101
      %p103 = scmp.ne.s32.totalorder %s94, %s95
      %p104 = scmp.eq.s32.totalorder %s28, 0
      %p105 = por %p103, %p104
      %p106 = scmp.ne.s32.totalorder %s94, %s95
      %p107 = scmp.eq.s32.totalorder %s29, 1
      %p108 = por %p106, %p107
      %p110 = scmp.ne.s32.totalorder %s95, %s109
      %p111 = scmp.eq.s32.totalorder %s29, 0
      %p112 = por %p110, %p111
      %s114 = sadd.s32 %s113, 1
      %p117 = scmp.eq.s32.totalorder %s23, 1
      %p118 = scmp.ne.s32.totalorder %s113, %s115
      %p119 = scmp.eq.s32.totalorder %s23, 0
      %p120 = por %p118, %p119
      %p121 = scmp.ne.s32.totalorder %s113, %s115
      %p122 = scmp.eq.s32.totalorder %s28, 1
      %p123 = por %p121, %p122
      %p124 = scmp.ne.s32.totalorder %s115, %s116
      %p125 = scmp.eq.s32.totalorder %s28, 0
      %p126 = por %p124, %p125
      %p127 = scmp.ne.s32.totalorder %s115, %s116
      %p128 = scmp.eq.s32.totalorder %s29, 1
      %p129 = por %p127, %p128
      %p131 = scmp.ne.s32.totalorder %s116, %s130
      %p132 = scmp.eq.s32.totalorder %s29, 0
      %p133 = por %p131, %p132
      %s134 = ssub.s32 %s30, %s42
      %s135 = ssub.s32 %s31, %s38
      %s136 = sor.u32 %s134, %s135
      %p137 = scmp.eq.s32.totalorder %s136, 0
      %s139 = sadd.s32 %s138, 1
      %s140 = scalar_select %p137, %s138, %s139
      %p143 = pneg %p137
      %p144 = scmp.eq.s32.totalorder %s23, 1
      %p145 = por %p143, %p144
      %p146 = scmp.ne.s32.totalorder %s138, %s141
      %p147 = scmp.eq.s32.totalorder %s23, 0
      %p148 = por %p146, %p147
      %p149 = scmp.ne.s32.totalorder %s138, %s141
      %p150 = scmp.eq.s32.totalorder %s28, 1
      %p151 = por %p149, %p150
      %p152 = scmp.ne.s32.totalorder %s141, %s142
      %p153 = scmp.eq.s32.totalorder %s28, 0
      %p154 = por %p152, %p153
      %p155 = scmp.ne.s32.totalorder %s141, %s142
      %p156 = scmp.eq.s32.totalorder %s29, 1
      %p157 = por %p155, %p156
      %p159 = scmp.ne.s32.totalorder %s142, %s158
      %p160 = scmp.eq.s32.totalorder %s29, 0
      %p161 = por %p159, %p160
      %s162 = ssub.s32 %s30, %s42
      %s163 = ssub.s32 %s31, %s38
      %s164 = sor.u32 %s162, %s163
      %p165 = scmp.eq.s32.totalorder %s164, 0
      %s167 = sadd.s32 %s166, 1
      %s168 = scalar_select %p165, %s166, %s167
      %p171 = pneg %p165
      %p172 = scmp.eq.s32.totalorder %s23, 1
      %p173 = por %p171, %p172
      %p174 = scmp.ne.s32.totalorder %s166, %s169
      %p175 = scmp.eq.s32.totalorder %s23, 0
      %p176 = por %p174, %p175
      %p177 = scmp.ne.s32.totalorder %s166, %s169
      %p178 = scmp.eq.s32.totalorder %s28, 1
      %p179 = por %p177, %p178
      %p180 = scmp.ne.s32.totalorder %s169, %s170
      %p181 = scmp.eq.s32.totalorder %s28, 0
      %p182 = por %p180, %p181
      %p183 = scmp.ne.s32.totalorder %s169, %s170
      %p184 = scmp.eq.s32.totalorder %s29, 1
      %p185 = por %p183, %p184
      %p187 = scmp.ne.s32.totalorder %s170, %s186
      %p188 = scmp.eq.s32.totalorder %s29, 0
      %p189 = por %p187, %p188
      %s190 = ssub.s32 %s30, %s42
      %s191 = ssub.s32 %s31, %s38
      %s192 = sor.u32 %s190, %s191
      %p193 = scmp.eq.s32.totalorder %s192, 0
      %s195 = sadd.s32 %s194, 1
      %s196 = scalar_select %p193, %s194, %s195
      %p199 = pneg %p193
      %p200 = scmp.eq.s32.totalorder %s23, 1
      %p201 = por %p199, %p200
      %p202 = scmp.ne.s32.totalorder %s194, %s197
      %p203 = scmp.eq.s32.totalorder %s23, 0
      %p204 = por %p202, %p203
      %p205 = scmp.ne.s32.totalorder %s194, %s197
      %p206 = scmp.eq.s32.totalorder %s28, 1
      %p207 = por %p205, %p206
      %p208 = scmp.ne.s32.totalorder %s197, %s198
      %p209 = scmp.eq.s32.totalorder %s28, 0
      %p210 = por %p208, %p209
      %p211 = scmp.ne.s32.totalorder %s197, %s198
      %p212 = scmp.eq.s32.totalorder %s29, 1
      %p213 = por %p211, %p212
      %p215 = scmp.ne.s32.totalorder %s198, %s214
      %p216 = scmp.eq.s32.totalorder %s29, 0
      %p217 = por %p215, %p216
      %p218 = scmp.le.s32.totalorder 1, %s23
      %p219 = scmp.lt.s32.totalorder %s23, 3
      %p220 = pnand %p218, %p219
      %p221 = pneg %p220
      // Predicated region
      $region9: #{tpu_custom_call.1} parent=5 // pred_check
        _
      $region10: #{tpu_custom_call.1} parent=5 // pred_check_branch
        %223 = sbr.rel (%p220) target = $region12
      $region11: #{tpu_custom_call.1} parent=5 // pred_region
        %s224 = ssub.s32 %s23, 1
        // Predicated region
        $region13: #{tpu_custom_call.1} parent=11 // pred_check
          %p225 = pneg %p84
        $region14: #{tpu_custom_call.1} parent=11 // pred_check_branch
          %227 = sbr.rel (%p225) target = $region16
        $region15: #{tpu_custom_call.1} parent=11 // pred_region
          %s229 = ssub.s32 512, 512
          %230 = vsyncadd [#allocation6], %s229
          %s231 = sshll.u32 [#allocation5], 4
          %s232 = int_to_ptr.vmem [resolvable:$true] %s231
          %237 = dma.hbm_to_vmem [thread:$0]  %s1, 512, %s232, [#allocation6], 128, 128, 8
        $region16: #{tpu_custom_call.1} parent=11 // pred_fallthru
          _
        // Predicated region
        $region17: #{tpu_custom_call.1} parent=11 // pred_check
          %p238 = pneg %p105
        $region18: #{tpu_custom_call.1} parent=11 // pred_check_branch
          %240 = sbr.rel (%p238) target = $region20
        $region19: #{tpu_custom_call.1} parent=11 // pred_region
          _
        $region20: #{tpu_custom_call.1} parent=11 // pred_fallthru
          _
        // Predicated region
        $region21: #{tpu_custom_call.1} parent=11 // pred_check
          %p241 = pneg %p126
        $region22: #{tpu_custom_call.1} parent=11 // pred_check_branch
          %243 = sbr.rel (%p241) target = $region24
        $region23: #{tpu_custom_call.1} parent=11 // pred_region
          _
        $region24: #{tpu_custom_call.1} parent=11 // pred_fallthru
          _
      $region12: #{tpu_custom_call.1} parent=5 // pred_fallthru
        _
      %p244 = scmp.lt.s32.totalorder %s23, 2
      // Predicated region
      $region25: #{tpu_custom_call.1} parent=5 // pred_check
        %p245 = pneg %p244
      $region26: #{tpu_custom_call.1} parent=5 // pred_check_branch
        %247 = sbr.rel (%p245) target = $region28
      $region27: #{tpu_custom_call.1} parent=5 // pred_region
        // Predicated region
        $region29: #{tpu_custom_call.1} parent=27 // pred_check
          %p248 = pneg %p57
        $region30: #{tpu_custom_call.1} parent=27 // pred_check_branch
          %250 = sbr.rel (%p248) target = $region32
        $region31: #{tpu_custom_call.1} parent=27 // pred_region
          %s251 = sand.u32 %s47, 1
          %s252 = scalar_lea.sflag [#allocation3], %s251
          %s253 = sand.u32 %s47, 1
          %s254 = smul.addr %s253, 8
          %s255 = scalar_lea.vmem [#allocation2], %s254
          %s257 = ssub.s32 128, 128
          %258 = vsyncadd %s252, %s257
          %s259 = sadd.s32 %s31, %s30
          %s260 = smul.addr %s259, 128
          %s261 = scalar_lea.hbm %s0, %s260
          %s263 = sshll.u32 %s255, 4
          %s264 = int_to_ptr.vmem [resolvable:$true] %s263
          %266 = dma.hbm_to_vmem [thread:$0]  %s261, 128, %s264, %s252
        $region32: #{tpu_custom_call.1} parent=27 // pred_fallthru
          _
      $region28: #{tpu_custom_call.1} parent=5 // pred_fallthru
        _
      %p267 = scmp.le.s32.totalorder 1, %s23
      %p268 = scmp.lt.s32.totalorder %s23, 3
      %p269 = pnand %p267, %p268
      %p270 = pneg %p269
      // Predicated region
      $region33: #{tpu_custom_call.1} parent=5 // pred_check
        _
      $region34: #{tpu_custom_call.1} parent=5 // pred_check_branch
        %272 = sbr.rel (%p269) target = $region36
      $region35: #{tpu_custom_call.1} parent=5 // pred_region
        %s273 = ssub.s32 %s23, 1
        %s274 = sand.u32 %s50, 1
        %s275 = scalar_lea.sflag [#allocation3], %s274
        %s276 = sand.u32 %s50, 1
        %s277 = smul.addr %s276, 8
        %s278 = scalar_lea.vmem [#allocation2], %s277
        // Predicated region
        $region37: #{tpu_custom_call.1} parent=35 // pred_check
          %p279 = pneg %p63
        $region38: #{tpu_custom_call.1} parent=35 // pred_check_branch
          %281 = sbr.rel (%p279) target = $region40
        $region39: #{tpu_custom_call.1} parent=35 // pred_region
          %282 = dma.done %s275, 128
        $region40: #{tpu_custom_call.1} parent=35 // pred_fallthru
          _
        // Predicated region
        $region41: #{tpu_custom_call.1} parent=35 // pred_check
          %p283 = pneg %p84
        $region42: #{tpu_custom_call.1} parent=35 // pred_check_branch
          %285 = sbr.rel (%p283) target = $region44
        $region43: #{tpu_custom_call.1} parent=35 // pred_region
          %286 = dma.done [#allocation6], 512
        $region44: #{tpu_custom_call.1} parent=35 // pred_fallthru
          _
        %s287 = sand.u32 %s50, 1
        %s288 = scalar_lea.sflag [#allocation3], %s287
        %s289 = sand.u32 %s50, 1
        %s290 = smul.addr %s289, 8
        %s291 = scalar_lea.vmem [#allocation2], %s290
        %p292 = pneg %p63
        %p293 = pneg %p60
        %p294 = pneg %p84
        %p295 = pneg %p81
        %p296 = pneg %p105
        %p297 = pneg %p102
        %p298 = pneg %p126
        %p299 = pneg %p123
        %p300 = pneg %p154
        %p301 = pneg %p151
        %s302 = sand.u32 %s141, 1
        %s303 = scalar_lea.sflag [#allocation4], %s302
        %s304 = sand.u32 %s141, 1
        %s305 = smul.addr %s304, 8
        %s306 = scalar_lea.vmem [#allocation7], %s305
        %p307 = pneg %p182
        %p308 = pneg %p179
        %s309 = sand.u32 %s28, 1
        %s310 = scalar_lea.sflag [#allocation9], %s309
        %s311 = sand.u32 %s169, 1
        %s312 = smul.addr %s311, 8
        %s313 = scalar_lea.vmem [#allocation8], %s312
        %p314 = pneg %p210
        %p315 = pneg %p207
        %s316 = sand.u32 %s28, 1
        %s317 = scalar_lea.sflag [#allocation9], %s316
        %s318 = sand.u32 %s197, 1
        %s319 = smul.addr %s318, 8
        %s320 = scalar_lea.vmem [#allocation10], %s319
        %v321 = vld [vmem:[%s278] sm:$0xff]
        %vm322 = vcmask 261120
        %v323 = vsel %vm322, %v321, 0.0
        %324 = vadd.xlane.f32.xlu0 %v323
        %v325 = vpop.xlane.xlu0 %324
        %v326 = vrcp.pop 32.0
        %v327 = vmul.f32 %v325, %v326
        %v328 = vsub.f32 %v321, %v327
        %v329 = vmul.f32 %v328, %v328
        %v330 = vsel %vm322, %v329, 0.0
        %331 = vadd.xlane.f32.xlu0 %v330
        %v332 = vpop.xlane.xlu0 %331
        %v333 = vmul.f32 %v332, %v326
        %v334 = vadd.f32 %v333, 1e-05
        %v335 = vrsqrt.pop %v334
        %v336 = vmul.f32 %v328, %v335
        %v337 = vld [vmem:[%s2] sm:$0x1]
        %v339 = vlaneseq
        %v340 = vshrl.u32 %v339, 7
        %v341 = vsub.s32 0, %v340
        %v342 = vrot.slane %v337, %v341
        %v344 = vmul.f32 %v336, %v342
        %v345 = vld [vmem:[%s3] sm:$0x1]
        %v347 = vlaneseq
        %v348 = vshrl.u32 %v347, 7
        %v349 = vsub.s32 0, %v348
        %v350 = vrot.slane %v345, %v349
        %v352 = vadd.f32 %v344, %v350
        %v353 = vld [vmem:[#allocation5] sm:$0xff]
        %v354 = vld [vmem:[#allocation5 + $0x8] sm:$0xff]
        %v355 = vld [vmem:[#allocation5 + $0x10] sm:$0xff]
        %v356 = vld [vmem:[#allocation5 + $0x18] sm:$0xff]
        %v358 = vsel %vm322, %v352, 0
        %360 = vmatprep.subr.mxu0 0.0
        %361 = vmatpush1.msra.mxu0 %v353
        %362 = vmatprep.subr.mxu0 0.0
        %363 = vmatpush1.msra.mxu0 %v354
        %364 = vmatprep.subr.mxu0 0.0
        %365 = vmatpush1.msra.mxu0 %v355
        %366 = vmatprep.subr.mxu0 0.0
        %367 = vmatpush1.msra.mxu0 %v356
        %368 = vmatprep.subr.mxu0 0.0
        %369 = vmatpush1.msra.mxu0 0.0
        %370 = vmatprep.subr.mxu0 0.0
        %371 = vmatpush1.msra.mxu0 0.0
        %372 = vmatprep.subr.mxu0 0.0
        %373 = vmatpush1.msra.mxu0 0.0
        %374 = vmatprep.subr.mxu0 0.0
        %375 = vmatpush1.msra.mxu0 0.0
        %376 = vmatprep.subr.mxu0 0.0
        %377 = vmatpush1.msra.mxu0 0.0
        %378 = vmatprep.subr.mxu0 0.0
        %379 = vmatpush1.msra.mxu0 0.0
        %380 = vmatprep.subr.mxu0 0.0
        %381 = vmatpush1.msra.mxu0 0.0
        %382 = vmatprep.subr.mxu0 0.0
        %383 = vmatpush1.msra.mxu0 0.0
        %384 = vmatprep.subr.mxu0 0.0
        %385 = vmatpush1.msra.mxu0 0.0
        %386 = vmatprep.subr.mxu0 0.0
        %387 = vmatpush1.msra.mxu0 0.0
        %388 = vmatprep.subr.mxu0 0.0
        %389 = vmatpush1.msra.mxu0 0.0
        %390 = vmatprep.subr.mxu0 0.0
        %391 = vmatpush1.msra.mxu0 0.0
        %392 = vmatprep.subr.mxu0 0.0
        %393 = vmatpush1.msra.mxu0 0.0
        %394 = vmatprep.subr.mxu0 0.0
        %395 = vmatpush1.msra.mxu0 0.0
        %396 = vmatprep.subr.mxu0 0.0
        %397 = vmatpush1.msra.mxu0 0.0
        %398 = vmatprep.subr.mxu0 0.0
        %399 = vmatpush1.msra.mxu0 0.0
        %400 = vmatprep.subr.mxu0 0.0
        %401 = vmatpush1.msra.mxu0 0.0
        %402 = vmatprep.subr.mxu0 0.0
        %403 = vmatpush1.msra.mxu0 0.0
        %404 = vmatprep.subr.mxu0 0.0
        %405 = vmatpush1.msra.mxu0 0.0
        %406 = vmatprep.subr.mxu0 0.0
        %407 = vmatpush1.msra.mxu0 0.0
        %408 = vmatprep.subr.mxu0 0.0
        %409 = vmatpush1.msra.mxu0 0.0
        %410 = vmatprep.subr.mxu0 0.0
        %411 = vmatpush1.msra.mxu0 0.0
        %412 = vmatprep.subr.mxu0 0.0
        %413 = vmatpush1.msra.mxu0 0.0
        %414 = vmatprep.subr.mxu0 0.0
        %415 = vmatpush1.msra.mxu0 0.0
        %416 = vmatprep.subr.mxu0 0.0
        %417 = vmatpush1.msra.mxu0 0.0
        %418 = vmatprep.subr.mxu0 0.0
        %419 = vmatpush1.msra.mxu0 0.0
        %420 = vmatprep.subr.mxu0 0.0
        %421 = vmatpush1.msra.mxu0 0.0
        %422 = vmatprep.subr.mxu0 0.0
        %423 = vmatpush1.msra.mxu0 0.0
        %424 = vmatprep.mubr.f32.mxu0 0.0
        %425 = vmatmul.mubr.f32.gmra.mrb[0].mxu0 %v358
        %v426 = vpop.f32.mrb[0].mxu0
        %v427 = vadd.f32 0.0, %v426
        %v428 = vpop.f32.mrb[0].mxu0
        %429 = vdwg.mxu0
        %430 = vst.msk [vmem:[%s306] sm:$0xff] %vm322, %v427
        %432 = vrot.lane.b32.xlu0 %v427, 96
        %v433 = vpop.permute.xlu0 %432
        %435 = vst.msk [vmem:[%s313] sm:$0xff] %vm322, %v433
        %436 = vrot.lane.b32.xlu0 %v427, 64
        %v437 = vpop.permute.xlu0 %436
        %439 = vst.msk [vmem:[%s320] sm:$0xff] %vm322, %v437
        %s440 = sand.u32 %s141, 1
        %s441 = scalar_lea.sflag [#allocation4], %s440
        %s442 = sand.u32 %s141, 1
        %s443 = smul.addr %s442, 8
        %s444 = scalar_lea.vmem [#allocation7], %s443
        %s445 = sand.u32 %s28, 1
        %s446 = scalar_lea.sflag [#allocation9], %s445
        %s447 = sand.u32 %s169, 1
        %s448 = smul.addr %s447, 8
        %s449 = scalar_lea.vmem [#allocation8], %s448
        %s450 = sand.u32 %s28, 1
        %s451 = scalar_lea.sflag [#allocation9], %s450
        %s452 = sand.u32 %s197, 1
        %s453 = smul.addr %s452, 8
        %s454 = scalar_lea.vmem [#allocation10], %s453
        // Predicated region
        $region45: #{tpu_custom_call.1} parent=35 // pred_check
          %p455 = pneg %p151
        $region46: #{tpu_custom_call.1} parent=35 // pred_check_branch
          %457 = sbr.rel (%p455) target = $region48
        $region47: #{tpu_custom_call.1} parent=35 // pred_region
          %s459 = ssub.s32 128, 128
          %460 = vsyncadd %s441, %s459
          %s461 = sadd.s32 %s33, %s32
          %s462 = smul.addr %s461, 128
          %s463 = scalar_lea.hbm %s4, %s462
          %s465 = sshll.u32 %s444, 4
          %s466 = int_to_ptr.vmem [resolvable:$true] %s465
          %468 = dma.vmem_to_hbm [thread:$0]  %s466, 128, %s463, %s441
        $region48: #{tpu_custom_call.1} parent=35 // pred_fallthru
          _
        // Predicated region
        $region49: #{tpu_custom_call.1} parent=35 // pred_check
          %p469 = pneg %p179
        $region50: #{tpu_custom_call.1} parent=35 // pred_check_branch
          %471 = sbr.rel (%p469) target = $region52
        $region51: #{tpu_custom_call.1} parent=35 // pred_region
          %s473 = ssub.s32 128, 128
          %474 = vsyncadd %s446, %s473
          %s475 = sadd.s32 %s33, %s32
          %s476 = smul.addr %s475, 128
          %s477 = scalar_lea.hbm %s5, %s476
          %s479 = sshll.u32 %s449, 4
          %s480 = int_to_ptr.vmem [resolvable:$true] %s479
          %482 = dma.vmem_to_hbm [thread:$0]  %s480, 128, %s477, %s446
        $region52: #{tpu_custom_call.1} parent=35 // pred_fallthru
          _
        // Predicated region
        $region53: #{tpu_custom_call.1} parent=35 // pred_check
          %p483 = pneg %p207
        $region54: #{tpu_custom_call.1} parent=35 // pred_check_branch
          %485 = sbr.rel (%p483) target = $region56
        $region55: #{tpu_custom_call.1} parent=35 // pred_region
          %s487 = ssub.s32 128, 128
          %488 = vsyncadd %s451, %s487
          %s489 = sadd.s32 %s33, %s32
          %s490 = smul.addr %s489, 128
          %s491 = scalar_lea.hbm %s6, %s490
          %s493 = sshll.u32 %s454, 4
          %s494 = int_to_ptr.vmem [resolvable:$true] %s493
          %496 = dma.vmem_to_hbm [thread:$0]  %s494, 128, %s491, %s451
        $region56: #{tpu_custom_call.1} parent=35 // pred_fallthru
          _
      $region36: #{tpu_custom_call.1} parent=5 // pred_fallthru
        _
      %p497 = scmp.le.s32.totalorder 2, %s23
      // Predicated region
      $region57: #{tpu_custom_call.1} parent=5 // pred_check
        %p498 = pneg %p497
      $region58: #{tpu_custom_call.1} parent=5 // pred_check_branch
        %500 = sbr.rel (%p498) target = $region60
      $region59: #{tpu_custom_call.1} parent=5 // pred_region
        %s501 = ssub.s32 %s23, 2
        // Predicated region
        $region61: #{tpu_custom_call.1} parent=59 // pred_check
          %p502 = pneg %p157
        $region62: #{tpu_custom_call.1} parent=59 // pred_check_branch
          %504 = sbr.rel (%p502) target = $region64
        $region63: #{tpu_custom_call.1} parent=59 // pred_region
          %s505 = sand.u32 %s142, 1
          %s506 = scalar_lea.sflag [#allocation4], %s505
          %s507 = sand.u32 %s142, 1
          %s508 = smul.addr %s507, 8
          %s509 = scalar_lea.vmem [#allocation7], %s508
          %510 = dma.done %s506, 128
        $region64: #{tpu_custom_call.1} parent=59 // pred_fallthru
          _
        // Predicated region
        $region65: #{tpu_custom_call.1} parent=59 // pred_check
          %p511 = pneg %p185
        $region66: #{tpu_custom_call.1} parent=59 // pred_check_branch
          %513 = sbr.rel (%p511) target = $region68
        $region67: #{tpu_custom_call.1} parent=59 // pred_region
          %s514 = sand.u32 %s29, 1
          %s515 = scalar_lea.sflag [#allocation9], %s514
          %s516 = sand.u32 %s170, 1
          %s517 = smul.addr %s516, 8
          %s518 = scalar_lea.vmem [#allocation8], %s517
          %519 = dma.done %s515, 128
        $region68: #{tpu_custom_call.1} parent=59 // pred_fallthru
          _
        // Predicated region
        $region69: #{tpu_custom_call.1} parent=59 // pred_check
          %p520 = pneg %p213
        $region70: #{tpu_custom_call.1} parent=59 // pred_check_branch
          %522 = sbr.rel (%p520) target = $region72
        $region71: #{tpu_custom_call.1} parent=59 // pred_region
          %s523 = sand.u32 %s29, 1
          %s524 = scalar_lea.sflag [#allocation9], %s523
          %s525 = sand.u32 %s198, 1
          %s526 = smul.addr %s525, 8
          %s527 = scalar_lea.vmem [#allocation10], %s526
          %528 = dma.done %s524, 128
        $region72: #{tpu_custom_call.1} parent=59 // pred_fallthru
          _
      $region60: #{tpu_custom_call.1} parent=5 // pred_fallthru
        _
    $region6: #{tpu_custom_call.1} parent=1 // loop_footer
      %s27 = sadd.s32 1, %s23
    $region7: #{tpu_custom_call.1} parent=1 // loop_footer_branch
      %22 = sbr.rel target = $region3
    $region8: #{tpu_custom_call.1} parent=1 // loop_exit
      _
    %529 = vsyncpa [#allocation3], 1
    %s530 = scalar_lea.sflag [#allocation3], 1
    %531 = vsyncpa %s530, 1
    %532 = vsyncpa [#allocation6], 1
    %533 = vsyncpa [#allocation4], 1
    %s534 = scalar_lea.sflag [#allocation4], 1
    %535 = vsyncpa %s534, 1
    %536 = vsyncpa [#allocation9], 1
    %s537 = scalar_lea.sflag [#allocation9], 1
    %538 = vsyncpa %s537, 1

</llo_original>
